<compile_context>
chip_gen: v7x
topology: tpu7x:2x2x1
jax: 0.10.0
libtpu: 0.0.40
codegen_flags: <defaults>
</compile_context>

<pallas_src>
import jax
import jax.numpy as jnp
from jax import lax
from jax.experimental import pallas as pl
from jax.experimental.pallas import tpu as pltpu


# ----------------------------- fused Pallas kernel -----------------------------

def _resnet_kernel(x_ref, wstem_ref, wblk_ref, b_ref, fcw_ref, fcb_ref,
                   poolt_ref, mask_ref, out_ref, slab_ref, stk_ref):
    f32 = jnp.float32
    hid = wstem_ref.shape[0]            # 16
    wp = x_ref.shape[-1]                # BT * (L1 + 2)  (padded, batch-folded width)

    mask_full = mask_ref[...]           # (1, Wp): 0 at per-sample pad columns
    mask_inner = mask_full[:, 1:wp - 1]

    # --- stem: Conv1d(C_in -> 16, k=3, stride=2, pad=3) + ReLU ------------------
    # Taps were stacked in the wrapper, so the whole stem is ONE MXU matmul.
    h = jnp.dot(wstem_ref[...], x_ref[...], preferred_element_type=f32)
    h = jnp.maximum(h + b_ref[0], 0.0) * mask_full      # (16, Wp); pads forced to 0
    slab_ref[...] = h                                   # seeds outer pad columns = 0

    def conv3(w48, bias, s):
        # Conv1d(16 -> 16, k=3, stride=1, pad=1): stack the 3 taps on the sublane
        # axis and issue a single (16,48)@(48,Wp-2) MXU matmul.
        stk_ref[0:hid, :] = s[:, 0:wp - 2]
        stk_ref[hid:2 * hid, :] = s[:, 1:wp - 1]
        stk_ref[2 * hid:3 * hid, :] = s[:, 2:wp]
        return jnp.dot(w48, stk_ref[...], preferred_element_type=f32) + bias

    # --- two residual blocks (activations stay VMEM / vreg resident) ------------
    for i in range(2):
        t = jnp.maximum(conv3(wblk_ref[2 * i], b_ref[1 + 2 * i], h), 0.0)
        slab_ref[:, 1:wp - 1] = t * mask_inner          # re-padded t
        t_pad = slab_ref[...]
        hn = conv3(wblk_ref[2 * i + 1], b_ref[2 + 2 * i], t_pad) + h[:, 1:wp - 1]
        slab_ref[:, 1:wp - 1] = jnp.maximum(hn, 0.0) * mask_inner
        h = slab_ref[...]                               # re-padded new h

    # --- AdaptiveAvgPool1d(1) + Linear (fused, batch-folded epilogue) -----------
    # pooled[b, c] = mean over sample b's interior columns of h[c, :]
    pooled = lax.dot_general(poolt_ref[...], h, (((1,), (1,)), ((), ())),
                             preferred_element_type=f32)          # (BT, 16)
    logits = jnp.dot(pooled, fcw_ref[...], preferred_element_type=f32) + fcb_ref[...]
    out_ref[...] = logits.astype(out_ref.dtype)                   # one (BT, NC) store


# ----------------------------- wrapper -----------------------------

def resnet_forward(x, params, *, batch_tiles=1):
    B, C_in, L = x.shape
    K, S, P = 3, 2, 3
    L1 = (L + 2 * P - K) // S + 1
    Lp = L1 + 2                                     # per-sample padded length
    hidden = params["conv1_w"].shape[0]             # 16
    num_classes = params["fc_w"].shape[0]
    assert B % batch_tiles == 0
    BT = B // batch_tiles
    Wt = BT * Lp                                    # lane width per grid step
    f32 = jnp.float32

    # Stem input: gather the stride-2 taps once, stack them on the channel axis
    # and lay out (3*C_in, batch-folded padded length) so the stem is one matmul.
    xp = jnp.pad(x, ((0, 0), (0, 0), (P, P)))
    taps = jnp.concatenate([xp[:, :, k:k + 2 * L1:2] for k in range(K)], axis=1)
    taps = jnp.pad(taps, ((0, 0), (0, 0), (1, 1)))                 # per-sample pad cols
    x_taps = jnp.transpose(taps, (1, 0, 2)).reshape(K * C_in, B * Lp)

    def tapstack(w):   # (O, C, 3) -> (O, 3*C): column index = k*C + c
        return jnp.transpose(w, (0, 2, 1)).reshape(w.shape[0], -1)

    w_stem = tapstack(params["conv1_w"])                           # (16, 3*C_in)
    w_blk = jnp.stack([tapstack(params["rb1"]["conv1_w"]),
                       tapstack(params["rb1"]["conv2_w"]),
                       tapstack(params["rb2"]["conv1_w"]),
                       tapstack(params["rb2"]["conv2_w"])])        # (4, 16, 48)
    b_all = jnp.stack([params["conv1_b"],
                       params["rb1"]["conv1_b"], params["rb1"]["conv2_b"],
                       params["rb2"]["conv1_b"], params["rb2"]["conv2_b"]])[..., None]  # (5,16,1)
    fc_wT = jnp.transpose(params["fc_w"])                          # (16, NC)
    fc_b = params["fc_b"].reshape(1, num_classes)

    # Pad mask + pooling matrix (identical for every batch tile).
    cols = jnp.arange(Wt)
    pos = cols % Lp
    interior = (pos >= 1) & (pos <= L1)
    mask = interior.astype(f32)[None, :]                           # (1, Wt)
    pool_t = ((cols // Lp)[None, :] == jnp.arange(BT)[:, None])
    pool_t = (pool_t & interior[None, :]).astype(f32) / L1         # (BT, Wt)

    args = (x_taps, w_stem, w_blk, b_all, fc_wT, fc_b, pool_t, mask)

    def const_spec(a):   # resident across grid steps (DMA'd once)
        zeros = (0,) * a.ndim
        return pl.BlockSpec(a.shape, lambda i, z=zeros: z)

    in_specs = [pl.BlockSpec((K * C_in, Wt), lambda i: (0, i))] + \
               [const_spec(a) for a in args[1:]]

    flops = (2 * B * L1 * hidden * (3 * C_in + 4 * 3 * hidden)
             + 2 * B * hidden * (Lp + num_classes))
    bytes_accessed = 4 * (sum(int(a.size) for a in args) + B * num_classes)

    return pl.pallas_call(
        _resnet_kernel,
        out_shape=jax.ShapeDtypeStruct((B, num_classes), jnp.float32),
        grid_spec=pltpu.PrefetchScalarGridSpec(
            num_scalar_prefetch=0,
            grid=(batch_tiles,),
            in_specs=in_specs,
            out_specs=pl.BlockSpec((BT, num_classes), lambda i: (i, 0)),
            scratch_shapes=[pltpu.VMEM((hidden, Wt), jnp.float32),        # padded slab
                            pltpu.VMEM((3 * hidden, Wt - 2), jnp.float32)]),  # tap stack
        compiler_params=pltpu.CompilerParams(
            dimension_semantics=("parallel",)),
        cost_estimate=pl.CostEstimate(flops=flops, transcendentals=0,
                                      bytes_accessed=bytes_accessed),
    )(*args)


# ----------------------------- parameters -----------------------------

def _uniform(key, shape, bound):
    return jax.random.uniform(key, shape, jnp.float32, -bound, bound)


def init_params(key, in_channels, num_classes):
    ks = jax.random.split(key, 12)

    def conv_params(kw, kb, o, c, ksz):
        bound = 1.0 / (c * ksz) ** 0.5
        return _uniform(kw, (o, c, ksz), bound), _uniform(kb, (o,), bound)

    c1w, c1b = conv_params(ks[0], ks[1], 16, in_channels, 3)
    r1c1w, r1c1b = conv_params(ks[2], ks[3], 16, 16, 3)
    r1c2w, r1c2b = conv_params(ks[4], ks[5], 16, 16, 3)
    r2c1w, r2c1b = conv_params(ks[6], ks[7], 16, 16, 3)
    r2c2w, r2c2b = conv_params(ks[8], ks[9], 16, 16, 3)
    fcb_bound = 1.0 / 16 ** 0.5
    fc_w = _uniform(ks[10], (num_classes, 16), fcb_bound)
    fc_b = _uniform(ks[11], (num_classes,), fcb_bound)
    return {
        "conv1_w": c1w, "conv1_b": c1b,
        "rb1": {"conv1_w": r1c1w, "conv1_b": r1c1b,
                "conv2_w": r1c2w, "conv2_b": r1c2b},
        "rb2": {"conv1_w": r2c1w, "conv1_b": r2c1b,
                "conv2_w": r2c2w, "conv2_b": r2c2b},
        "fc_w": fc_w, "fc_b": fc_b,
    }


# ----------------------------- pure-JAX reference -----------------------------

def _conv1d_ref(x, w, b, stride, padding):
    y = lax.conv_general_dilated(x, w, (stride,), [(padding, padding)],
                                 dimension_numbers=("NCH", "OIH", "NCH"))
    return y + b[None, :, None]


def resnet_ref(x, p):
    h = jax.nn.relu(_conv1d_ref(x, p["conv1_w"], p["conv1_b"], 2, 3))
    for rb in (p["rb1"], p["rb2"]):
        t = jax.nn.relu(_conv1d_ref(h, rb["conv1_w"], rb["conv1_b"], 1, 1))
        t = _conv1d_ref(t, rb["conv2_w"], rb["conv2_b"], 1, 1)
        h = jax.nn.relu(t + h)
    pooled = jnp.mean(h, axis=2)
    return pooled @ p["fc_w"].T + p["fc_b"]


# ----------------------------- main -----------------------------

if __name__ == "__main__":
    B, C_IN, L, NUM_CLASSES = 2, 4, 16, 5
    key = jax.random.PRNGKey(0)
    k_x, k_p = jax.random.split(key)
    x = jax.random.normal(k_x, (B, C_IN, L), jnp.float32)
    params = init_params(k_p, C_IN, NUM_CLASSES)

    out = jax.jit(resnet_forward)(x, params)
    out = jax.block_until_ready(out)

    ref = resnet_ref(x, params)
    assert out.shape == (B, NUM_CLASSES), out.shape
    assert jnp.allclose(out, ref, atol=1e-3, rtol=1e-3), (out, ref)
    print("KERNEL_OK")
</pallas_src>

<mosaic_0001>
module attributes {stable_mosaic.version = 11 : i64} {
  func.func @_resnet_kernel(%arg0: i32, %arg1: memref<12x24xf32, #tpu.memory_space<vmem>>, %arg2: memref<16x12xf32, #tpu.memory_space<vmem>>, %arg3: memref<4x16x48xf32, #tpu.memory_space<vmem>>, %arg4: memref<5x16x1xf32, #tpu.memory_space<vmem>>, %arg5: memref<16x5xf32, #tpu.memory_space<vmem>>, %arg6: memref<1x5xf32, #tpu.memory_space<vmem>>, %arg7: memref<2x24xf32, #tpu.memory_space<vmem>>, %arg8: memref<1x24xf32, #tpu.memory_space<vmem>>, %arg9: memref<2x5xf32, #tpu.memory_space<vmem>>, %arg10: memref<16x24xf32, #tpu.memory_space<vmem>>, %arg11: memref<48x22xf32, #tpu.memory_space<vmem>>) attributes {dimension_semantics = [#tpu.dimension_semantics<parallel>], iteration_bounds = array<i64: 1>, scalar_prefetch = 0 : i64, scratch_operands = 2 : i64, tpu.core_type = #tpu.core_type<tc>, window_params = [{transform_indices = @transform_0, window_bounds = array<i64: 12, 24>}, {pipeline_mode = #tpu.pipeline_mode<synchronous>, transform_indices = @transform_1, window_bounds = array<i64: 16, 12>}, {pipeline_mode = #tpu.pipeline_mode<synchronous>, transform_indices = @transform_2, window_bounds = array<i64: 4, 16, 48>}, {pipeline_mode = #tpu.pipeline_mode<synchronous>, transform_indices = @transform_3, window_bounds = array<i64: 5, 16, 1>}, {pipeline_mode = #tpu.pipeline_mode<synchronous>, transform_indices = @transform_4, window_bounds = array<i64: 16, 5>}, {pipeline_mode = #tpu.pipeline_mode<synchronous>, transform_indices = @transform_5, window_bounds = array<i64: 1, 5>}, {pipeline_mode = #tpu.pipeline_mode<synchronous>, transform_indices = @transform_6, window_bounds = array<i64: 2, 24>}, {pipeline_mode = #tpu.pipeline_mode<synchronous>, transform_indices = @transform_7, window_bounds = array<i64: 1, 24>}, {transform_indices = @transform_8, window_bounds = array<i64: 2, 5>}]} {
    %c0 = arith.constant 0 : index
    %c0_0 = arith.constant 0 : index
    %0 = vector.load %arg8[%c0, %c0_0] : memref<1x24xf32, #tpu.memory_space<vmem>>, vector<1x24xf32>
    %1 = vector.extract_strided_slice %0 {offsets = [0, 1], sizes = [1, 22], strides = [1, 1]} : vector<1x24xf32> to vector<1x22xf32>
    %c0_1 = arith.constant 0 : index
    %c0_2 = arith.constant 0 : index
    %2 = vector.load %arg2[%c0_1, %c0_2] : memref<16x12xf32, #tpu.memory_space<vmem>>, vector<16x12xf32>
    %c0_3 = arith.constant 0 : index
    %c0_4 = arith.constant 0 : index
    %3 = vector.load %arg1[%c0_3, %c0_4] : memref<12x24xf32, #tpu.memory_space<vmem>>, vector<12x24xf32>
    %cst = arith.constant dense<0.000000e+00> : vector<16x24xf32>
    %4 = tpu.matmul %2, %3, %cst {dimension_numbers = #tpu.dot_dimension_numbers<[1], [0], [0], [1], [0, 0, 1, 1], [], []>} : vector<16x12xf32>, vector<12x24xf32>, vector<16x24xf32> -> vector<16x24xf32>
    %c0_5 = arith.constant 0 : index
    %c0_6 = arith.constant 0 : index
    %c0_7 = arith.constant 0 : index
    %5 = vector.load %arg4[%c0_5, %c0_6, %c0_7] : memref<5x16x1xf32, #tpu.memory_space<vmem>>, vector<1x16x1xf32>
    %6 = vector.shape_cast %5 : vector<1x16x1xf32> to vector<16x1xf32>
    %7 = vector.broadcast %6 : vector<16x1xf32> to vector<16x24xf32>
    %8 = arith.addf %4, %7 : vector<16x24xf32>
    %cst_8 = arith.constant 0.000000e+00 : f32
    %9 = vector.broadcast %cst_8 : f32 to vector<16x24xf32>
    %10 = arith.maximumf %8, %9 : vector<16x24xf32>
    %11 = vector.broadcast %0 : vector<1x24xf32> to vector<16x24xf32>
    %12 = arith.mulf %10, %11 : vector<16x24xf32>
    %c0_9 = arith.constant 0 : index
    %c0_10 = arith.constant 0 : index
    %13 = vector.load %arg10[%c0_9, %c0_10] : memref<16x24xf32, #tpu.memory_space<vmem>>, vector<16x24xf32>
    tpu.vector_store %arg10[%c0_9, %c0_10], %12 {strides = array<i32>} : memref<16x24xf32, #tpu.memory_space<vmem>>, vector<16x24xf32>,
    %c0_11 = arith.constant 0 : index
    %c0_12 = arith.constant 0 : index
    %c0_13 = arith.constant 0 : index
    %14 = vector.load %arg3[%c0_11, %c0_12, %c0_13] : memref<4x16x48xf32, #tpu.memory_space<vmem>>, vector<1x16x48xf32>
    %15 = vector.shape_cast %14 : vector<1x16x48xf32> to vector<16x48xf32>
    %c1 = arith.constant 1 : index
    %c0_14 = arith.constant 0 : index
    %c0_15 = arith.constant 0 : index
    %16 = vector.load %arg4[%c1, %c0_14, %c0_15] : memref<5x16x1xf32, #tpu.memory_space<vmem>>, vector<1x16x1xf32>
    %17 = vector.shape_cast %16 : vector<1x16x1xf32> to vector<16x1xf32>
    %18 = vector.extract_strided_slice %12 {offsets = [0, 0], sizes = [16, 22], strides = [1, 1]} : vector<16x24xf32> to vector<16x22xf32>
    %c0_16 = arith.constant 0 : index
    %c0_17 = arith.constant 0 : index
    %19 = vector.load %arg11[%c0_16, %c0_17] : memref<48x22xf32, #tpu.memory_space<vmem>>, vector<16x22xf32>
    tpu.vector_store %arg11[%c0_16, %c0_17], %18 {strides = array<i32>} : memref<48x22xf32, #tpu.memory_space<vmem>>, vector<16x22xf32>,
    %20 = vector.extract_strided_slice %12 {offsets = [0, 1], sizes = [16, 22], strides = [1, 1]} : vector<16x24xf32> to vector<16x22xf32>
    %c16 = arith.constant 16 : index
    %c0_18 = arith.constant 0 : index
    %21 = vector.load %arg11[%c16, %c0_18] : memref<48x22xf32, #tpu.memory_space<vmem>>, vector<16x22xf32>
    tpu.vector_store %arg11[%c16, %c0_18], %20 {strides = array<i32>} : memref<48x22xf32, #tpu.memory_space<vmem>>, vector<16x22xf32>,
    %22 = vector.extract_strided_slice %12 {offsets = [0, 2], sizes = [16, 22], strides = [1, 1]} : vector<16x24xf32> to vector<16x22xf32>
    %c32 = arith.constant 32 : index
    %c0_19 = arith.constant 0 : index
    %23 = vector.load %arg11[%c32, %c0_19] : memref<48x22xf32, #tpu.memory_space<vmem>>, vector<16x22xf32>
    tpu.vector_store %arg11[%c32, %c0_19], %22 {strides = array<i32>} : memref<48x22xf32, #tpu.memory_space<vmem>>, vector<16x22xf32>,
    %c0_20 = arith.constant 0 : index
    %c0_21 = arith.constant 0 : index
    %24 = vector.load %arg11[%c0_20, %c0_21] : memref<48x22xf32, #tpu.memory_space<vmem>>, vector<48x22xf32>
    %cst_22 = arith.constant dense<0.000000e+00> : vector<16x22xf32>
    %25 = tpu.matmul %15, %24, %cst_22 {dimension_numbers = #tpu.dot_dimension_numbers<[1], [0], [0], [1], [0, 0, 1, 1], [], []>} : vector<16x48xf32>, vector<48x22xf32>, vector<16x22xf32> -> vector<16x22xf32>
    %26 = vector.broadcast %17 : vector<16x1xf32> to vector<16x22xf32>
    %27 = arith.addf %25, %26 : vector<16x22xf32>
    %cst_23 = arith.constant 0.000000e+00 : f32
    %28 = vector.broadcast %cst_23 : f32 to vector<16x22xf32>
    %29 = arith.maximumf %27, %28 : vector<16x22xf32>
    %30 = vector.broadcast %1 : vector<1x22xf32> to vector<16x22xf32>
    %31 = arith.mulf %29, %30 : vector<16x22xf32>
    %c0_24 = arith.constant 0 : index
    %c1_25 = arith.constant 1 : index
    %32 = vector.load %arg10[%c0_24, %c1_25] : memref<16x24xf32, #tpu.memory_space<vmem>>, vector<16x22xf32>
    tpu.vector_store %arg10[%c0_24, %c1_25], %31 {strides = array<i32>} : memref<16x24xf32, #tpu.memory_space<vmem>>, vector<16x22xf32>,
    %c0_26 = arith.constant 0 : index
    %c0_27 = arith.constant 0 : index
    %33 = vector.load %arg10[%c0_26, %c0_27] : memref<16x24xf32, #tpu.memory_space<vmem>>, vector<16x24xf32>
    %c1_28 = arith.constant 1 : index
    %c0_29 = arith.constant 0 : index
    %c0_30 = arith.constant 0 : index
    %34 = vector.load %arg3[%c1_28, %c0_29, %c0_30] : memref<4x16x48xf32, #tpu.memory_space<vmem>>, vector<1x16x48xf32>
    %35 = vector.shape_cast %34 : vector<1x16x48xf32> to vector<16x48xf32>
    %c2 = arith.constant 2 : index
    %c0_31 = arith.constant 0 : index
    %c0_32 = arith.constant 0 : index
    %36 = vector.load %arg4[%c2, %c0_31, %c0_32] : memref<5x16x1xf32, #tpu.memory_space<vmem>>, vector<1x16x1xf32>
    %37 = vector.shape_cast %36 : vector<1x16x1xf32> to vector<16x1xf32>
    %38 = vector.extract_strided_slice %33 {offsets = [0, 0], sizes = [16, 22], strides = [1, 1]} : vector<16x24xf32> to vector<16x22xf32>
    %c0_33 = arith.constant 0 : index
    %c0_34 = arith.constant 0 : index
    %39 = vector.load %arg11[%c0_33, %c0_34] : memref<48x22xf32, #tpu.memory_space<vmem>>, vector<16x22xf32>
    tpu.vector_store %arg11[%c0_33, %c0_34], %38 {strides = array<i32>} : memref<48x22xf32, #tpu.memory_space<vmem>>, vector<16x22xf32>,
    %40 = vector.extract_strided_slice %33 {offsets = [0, 1], sizes = [16, 22], strides = [1, 1]} : vector<16x24xf32> to vector<16x22xf32>
    %c16_35 = arith.constant 16 : index
    %c0_36 = arith.constant 0 : index
    %41 = vector.load %arg11[%c16_35, %c0_36] : memref<48x22xf32, #tpu.memory_space<vmem>>, vector<16x22xf32>
    tpu.vector_store %arg11[%c16_35, %c0_36], %40 {strides = array<i32>} : memref<48x22xf32, #tpu.memory_space<vmem>>, vector<16x22xf32>,
    %42 = vector.extract_strided_slice %33 {offsets = [0, 2], sizes = [16, 22], strides = [1, 1]} : vector<16x24xf32> to vector<16x22xf32>
    %c32_37 = arith.constant 32 : index
    %c0_38 = arith.constant 0 : index
    %43 = vector.load %arg11[%c32_37, %c0_38] : memref<48x22xf32, #tpu.memory_space<vmem>>, vector<16x22xf32>
    tpu.vector_store %arg11[%c32_37, %c0_38], %42 {strides = array<i32>} : memref<48x22xf32, #tpu.memory_space<vmem>>, vector<16x22xf32>,
    %c0_39 = arith.constant 0 : index
    %c0_40 = arith.constant 0 : index
    %44 = vector.load %arg11[%c0_39, %c0_40] : memref<48x22xf32, #tpu.memory_space<vmem>>, vector<48x22xf32>
    %cst_41 = arith.constant dense<0.000000e+00> : vector<16x22xf32>
    %45 = tpu.matmul %35, %44, %cst_41 {dimension_numbers = #tpu.dot_dimension_numbers<[1], [0], [0], [1], [0, 0, 1, 1], [], []>} : vector<16x48xf32>, vector<48x22xf32>, vector<16x22xf32> -> vector<16x22xf32>
    %46 = vector.broadcast %37 : vector<16x1xf32> to vector<16x22xf32>
    %47 = arith.addf %45, %46 : vector<16x22xf32>
    %48 = vector.extract_strided_slice %12 {offsets = [0, 1], sizes = [16, 22], strides = [1, 1]} : vector<16x24xf32> to vector<16x22xf32>
    %49 = arith.addf %47, %48 : vector<16x22xf32>
    %cst_42 = arith.constant 0.000000e+00 : f32
    %50 = vector.broadcast %cst_42 : f32 to vector<16x22xf32>
    %51 = arith.maximumf %49, %50 : vector<16x22xf32>
    %52 = vector.broadcast %1 : vector<1x22xf32> to vector<16x22xf32>
    %53 = arith.mulf %51, %52 : vector<16x22xf32>
    %c0_43 = arith.constant 0 : index
    %c1_44 = arith.constant 1 : index
    %54 = vector.load %arg10[%c0_43, %c1_44] : memref<16x24xf32, #tpu.memory_space<vmem>>, vector<16x22xf32>
    tpu.vector_store %arg10[%c0_43, %c1_44], %53 {strides = array<i32>} : memref<16x24xf32, #tpu.memory_space<vmem>>, vector<16x22xf32>,
    %c0_45 = arith.constant 0 : index
    %c0_46 = arith.constant 0 : index
    %55 = vector.load %arg10[%c0_45, %c0_46] : memref<16x24xf32, #tpu.memory_space<vmem>>, vector<16x24xf32>
    %c2_47 = arith.constant 2 : index
    %c0_48 = arith.constant 0 : index
    %c0_49 = arith.constant 0 : index
    %56 = vector.load %arg3[%c2_47, %c0_48, %c0_49] : memref<4x16x48xf32, #tpu.memory_space<vmem>>, vector<1x16x48xf32>
    %57 = vector.shape_cast %56 : vector<1x16x48xf32> to vector<16x48xf32>
    %c3 = arith.constant 3 : index
    %c0_50 = arith.constant 0 : index
    %c0_51 = arith.constant 0 : index
    %58 = vector.load %arg4[%c3, %c0_50, %c0_51] : memref<5x16x1xf32, #tpu.memory_space<vmem>>, vector<1x16x1xf32>
    %59 = vector.shape_cast %58 : vector<1x16x1xf32> to vector<16x1xf32>
    %60 = vector.extract_strided_slice %55 {offsets = [0, 0], sizes = [16, 22], strides = [1, 1]} : vector<16x24xf32> to vector<16x22xf32>
    %c0_52 = arith.constant 0 : index
    %c0_53 = arith.constant 0 : index
    %61 = vector.load %arg11[%c0_52, %c0_53] : memref<48x22xf32, #tpu.memory_space<vmem>>, vector<16x22xf32>
    tpu.vector_store %arg11[%c0_52, %c0_53], %60 {strides = array<i32>} : memref<48x22xf32, #tpu.memory_space<vmem>>, vector<16x22xf32>,
    %62 = vector.extract_strided_slice %55 {offsets = [0, 1], sizes = [16, 22], strides = [1, 1]} : vector<16x24xf32> to vector<16x22xf32>
    %c16_54 = arith.constant 16 : index
    %c0_55 = arith.constant 0 : index
    %63 = vector.load %arg11[%c16_54, %c0_55] : memref<48x22xf32, #tpu.memory_space<vmem>>, vector<16x22xf32>
    tpu.vector_store %arg11[%c16_54, %c0_55], %62 {strides = array<i32>} : memref<48x22xf32, #tpu.memory_space<vmem>>, vector<16x22xf32>,
    %64 = vector.extract_strided_slice %55 {offsets = [0, 2], sizes = [16, 22], strides = [1, 1]} : vector<16x24xf32> to vector<16x22xf32>
    %c32_56 = arith.constant 32 : index
    %c0_57 = arith.constant 0 : index
    %65 = vector.load %arg11[%c32_56, %c0_57] : memref<48x22xf32, #tpu.memory_space<vmem>>, vector<16x22xf32>
    tpu.vector_store %arg11[%c32_56, %c0_57], %64 {strides = array<i32>} : memref<48x22xf32, #tpu.memory_space<vmem>>, vector<16x22xf32>,
    %c0_58 = arith.constant 0 : index
    %c0_59 = arith.constant 0 : index
    %66 = vector.load %arg11[%c0_58, %c0_59] : memref<48x22xf32, #tpu.memory_space<vmem>>, vector<48x22xf32>
    %cst_60 = arith.constant dense<0.000000e+00> : vector<16x22xf32>
    %67 = tpu.matmul %57, %66, %cst_60 {dimension_numbers = #tpu.dot_dimension_numbers<[1], [0], [0], [1], [0, 0, 1, 1], [], []>} : vector<16x48xf32>, vector<48x22xf32>, vector<16x22xf32> -> vector<16x22xf32>
    %68 = vector.broadcast %59 : vector<16x1xf32> to vector<16x22xf32>
    %69 = arith.addf %67, %68 : vector<16x22xf32>
    %cst_61 = arith.constant 0.000000e+00 : f32
    %70 = vector.broadcast %cst_61 : f32 to vector<16x22xf32>
    %71 = arith.maximumf %69, %70 : vector<16x22xf32>
    %72 = vector.broadcast %1 : vector<1x22xf32> to vector<16x22xf32>
    %73 = arith.mulf %71, %72 : vector<16x22xf32>
    %c0_62 = arith.constant 0 : index
    %c1_63 = arith.constant 1 : index
    %74 = vector.load %arg10[%c0_62, %c1_63] : memref<16x24xf32, #tpu.memory_space<vmem>>, vector<16x22xf32>
    tpu.vector_store %arg10[%c0_62, %c1_63], %73 {strides = array<i32>} : memref<16x24xf32, #tpu.memory_space<vmem>>, vector<16x22xf32>,
    %c0_64 = arith.constant 0 : index
    %c0_65 = arith.constant 0 : index
    %75 = vector.load %arg10[%c0_64, %c0_65] : memref<16x24xf32, #tpu.memory_space<vmem>>, vector<16x24xf32>
    %c3_66 = arith.constant 3 : index
    %c0_67 = arith.constant 0 : index
    %c0_68 = arith.constant 0 : index
    %76 = vector.load %arg3[%c3_66, %c0_67, %c0_68] : memref<4x16x48xf32, #tpu.memory_space<vmem>>, vector<1x16x48xf32>
    %77 = vector.shape_cast %76 : vector<1x16x48xf32> to vector<16x48xf32>
    %c4 = arith.constant 4 : index
    %c0_69 = arith.constant 0 : index
    %c0_70 = arith.constant 0 : index
    %78 = vector.load %arg4[%c4, %c0_69, %c0_70] : memref<5x16x1xf32, #tpu.memory_space<vmem>>, vector<1x16x1xf32>
    %79 = vector.shape_cast %78 : vector<1x16x1xf32> to vector<16x1xf32>
    %80 = vector.extract_strided_slice %75 {offsets = [0, 0], sizes = [16, 22], strides = [1, 1]} : vector<16x24xf32> to vector<16x22xf32>
    %c0_71 = arith.constant 0 : index
    %c0_72 = arith.constant 0 : index
    %81 = vector.load %arg11[%c0_71, %c0_72] : memref<48x22xf32, #tpu.memory_space<vmem>>, vector<16x22xf32>
    tpu.vector_store %arg11[%c0_71, %c0_72], %80 {strides = array<i32>} : memref<48x22xf32, #tpu.memory_space<vmem>>, vector<16x22xf32>,
    %82 = vector.extract_strided_slice %75 {offsets = [0, 1], sizes = [16, 22], strides = [1, 1]} : vector<16x24xf32> to vector<16x22xf32>
    %c16_73 = arith.constant 16 : index
    %c0_74 = arith.constant 0 : index
    %83 = vector.load %arg11[%c16_73, %c0_74] : memref<48x22xf32, #tpu.memory_space<vmem>>, vector<16x22xf32>
    tpu.vector_store %arg11[%c16_73, %c0_74], %82 {strides = array<i32>} : memref<48x22xf32, #tpu.memory_space<vmem>>, vector<16x22xf32>,
    %84 = vector.extract_strided_slice %75 {offsets = [0, 2], sizes = [16, 22], strides = [1, 1]} : vector<16x24xf32> to vector<16x22xf32>
    %c32_75 = arith.constant 32 : index
    %c0_76 = arith.constant 0 : index
    %85 = vector.load %arg11[%c32_75, %c0_76] : memref<48x22xf32, #tpu.memory_space<vmem>>, vector<16x22xf32>
    tpu.vector_store %arg11[%c32_75, %c0_76], %84 {strides = array<i32>} : memref<48x22xf32, #tpu.memory_space<vmem>>, vector<16x22xf32>,
    %c0_77 = arith.constant 0 : index
    %c0_78 = arith.constant 0 : index
    %86 = vector.load %arg11[%c0_77, %c0_78] : memref<48x22xf32, #tpu.memory_space<vmem>>, vector<48x22xf32>
    %cst_79 = arith.constant dense<0.000000e+00> : vector<16x22xf32>
    %87 = tpu.matmul %77, %86, %cst_79 {dimension_numbers = #tpu.dot_dimension_numbers<[1], [0], [0], [1], [0, 0, 1, 1], [], []>} : vector<16x48xf32>, vector<48x22xf32>, vector<16x22xf32> -> vector<16x22xf32>
    %88 = vector.broadcast %79 : vector<16x1xf32> to vector<16x22xf32>
    %89 = arith.addf %87, %88 : vector<16x22xf32>
    %90 = vector.extract_strided_slice %55 {offsets = [0, 1], sizes = [16, 22], strides = [1, 1]} : vector<16x24xf32> to vector<16x22xf32>
    %91 = arith.addf %89, %90 : vector<16x22xf32>
    %cst_80 = arith.constant 0.000000e+00 : f32
    %92 = vector.broadcast %cst_80 : f32 to vector<16x22xf32>
    %93 = arith.maximumf %91, %92 : vector<16x22xf32>
    %94 = vector.broadcast %1 : vector<1x22xf32> to vector<16x22xf32>
    %95 = arith.mulf %93, %94 : vector<16x22xf32>
    %c0_81 = arith.constant 0 : index
    %c1_82 = arith.constant 1 : index
    %96 = vector.load %arg10[%c0_81, %c1_82] : memref<16x24xf32, #tpu.memory_space<vmem>>, vector<16x22xf32>
    tpu.vector_store %arg10[%c0_81, %c1_82], %95 {strides = array<i32>} : memref<16x24xf32, #tpu.memory_space<vmem>>, vector<16x22xf32>,
    %c0_83 = arith.constant 0 : index
    %c0_84 = arith.constant 0 : index
    %97 = vector.load %arg10[%c0_83, %c0_84] : memref<16x24xf32, #tpu.memory_space<vmem>>, vector<16x24xf32>
    %c0_85 = arith.constant 0 : index
    %c0_86 = arith.constant 0 : index
    %98 = vector.load %arg7[%c0_85, %c0_86] : memref<2x24xf32, #tpu.memory_space<vmem>>, vector<2x24xf32>
    %cst_87 = arith.constant dense<0.000000e+00> : vector<2x16xf32>
    %99 = tpu.matmul %98, %97, %cst_87 {dimension_numbers = #tpu.dot_dimension_numbers<[1], [1], [0], [0], [0, 0, 1, 0], [], []>} : vector<2x24xf32>, vector<16x24xf32>, vector<2x16xf32> -> vector<2x16xf32>
    %c0_88 = arith.constant 0 : index
    %c0_89 = arith.constant 0 : index
    %100 = vector.load %arg5[%c0_88, %c0_89] : memref<16x5xf32, #tpu.memory_space<vmem>>, vector<16x5xf32>
    %cst_90 = arith.constant dense<0.000000e+00> : vector<2x5xf32>
    %101 = tpu.matmul %99, %100, %cst_90 {dimension_numbers = #tpu.dot_dimension_numbers<[1], [0], [0], [1], [0, 0, 1, 1], [], []>} : vector<2x16xf32>, vector<16x5xf32>, vector<2x5xf32> -> vector<2x5xf32>
    %c0_91 = arith.constant 0 : index
    %c0_92 = arith.constant 0 : index
    %102 = vector.load %arg6[%c0_91, %c0_92] : memref<1x5xf32, #tpu.memory_space<vmem>>, vector<1x5xf32>
    %103 = vector.broadcast %102 : vector<1x5xf32> to vector<2x5xf32>
    %104 = arith.addf %101, %103 : vector<2x5xf32>
    %c0_93 = arith.constant 0 : index
    %c0_94 = arith.constant 0 : index
    %105 = vector.load %arg9[%c0_93, %c0_94] : memref<2x5xf32, #tpu.memory_space<vmem>>, vector<2x5xf32>
    tpu.vector_store %arg9[%c0_93, %c0_94], %104 {strides = array<i32>} : memref<2x5xf32, #tpu.memory_space<vmem>>, vector<2x5xf32>,
    return
  }
  func.func @transform_0(%arg0: i32) -> (i32, i32) {
    %c0_i32 = arith.constant 0 : i32
    %c0_i32_0 = arith.constant 0 : i32
    return %c0_i32, %arg0 : i32, i32
  }
  func.func @transform_1(%arg0: i32) -> (i32, i32) {
    %c0_i32 = arith.constant 0 : i32
    %c0_i32_0 = arith.constant 0 : i32
    %c0_i32_1 = arith.constant 0 : i32
    return %c0_i32, %c0_i32_0 : i32, i32
  }
  func.func @transform_2(%arg0: i32) -> (i32, i32, i32) {
    %c0_i32 = arith.constant 0 : i32
    %c0_i32_0 = arith.constant 0 : i32
    %c0_i32_1 = arith.constant 0 : i32
    %c0_i32_2 = arith.constant 0 : i32
    return %c0_i32, %c0_i32_0, %c0_i32_1 : i32, i32, i32
  }
  func.func @transform_3(%arg0: i32) -> (i32, i32, i32) {
    %c0_i32 = arith.constant 0 : i32
    %c0_i32_0 = arith.constant 0 : i32
    %c0_i32_1 = arith.constant 0 : i32
    %c0_i32_2 = arith.constant 0 : i32
    return %c0_i32, %c0_i32_0, %c0_i32_1 : i32, i32, i32
  }
  func.func @transform_4(%arg0: i32) -> (i32, i32) {
    %c0_i32 = arith.constant 0 : i32
    %c0_i32_0 = arith.constant 0 : i32
    %c0_i32_1 = arith.constant 0 : i32
    return %c0_i32, %c0_i32_0 : i32, i32
  }
  func.func @transform_5(%arg0: i32) -> (i32, i32) {
    %c0_i32 = arith.constant 0 : i32
    %c0_i32_0 = arith.constant 0 : i32
    %c0_i32_1 = arith.constant 0 : i32
    return %c0_i32, %c0_i32_0 : i32, i32
  }
  func.func @transform_6(%arg0: i32) -> (i32, i32) {
    %c0_i32 = arith.constant 0 : i32
    %c0_i32_0 = arith.constant 0 : i32
    %c0_i32_1 = arith.constant 0 : i32
    return %c0_i32, %c0_i32_0 : i32, i32
  }
  func.func @transform_7(%arg0: i32) -> (i32, i32) {
    %c0_i32 = arith.constant 0 : i32
    %c0_i32_0 = arith.constant 0 : i32
    %c0_i32_1 = arith.constant 0 : i32
    return %c0_i32, %c0_i32_0 : i32, i32
  }
  func.func @transform_8(%arg0: i32) -> (i32, i32) {
    %c0_i32 = arith.constant 0 : i32
    %c0_i32_0 = arith.constant 0 : i32
    return %arg0, %c0_i32 : i32, i32
  }
}

</mosaic_0001>

<llo_original>
// kernel: resnet_forward.1
$region0: #{resnet_forward.1}
  #allocation0 [shape = 'u32[]', space=smem, size = 0x4, offset = 0x4, fixed_abs, tag = 'smem constant byte address 0x4 - core index']
  #allocation1 [shape = 'u32[144,128]{1,0:T(1,128)}', space=vmem, size = 0x12000, scoped, tag = 'internal scratch']
  #allocation2 [shape = 'f32[16,24]{1,0:T(8,128)}', space=vmem, size = 0x2000, scoped, tag = 'scratch operand']
  #allocation3 [shape = 'f32[48,22]{1,0:T(8,128)}', space=vmem, size = 0x6000, scoped, tag = 'scratch operand']
  %s0 = inlined_call_operand.vmem [shape: f32[12,24], index: 0, kind: input, shape index: {}]
  %s1 = inlined_call_operand.vmem [shape: f32[16,12], index: 1, kind: input, shape index: {}]
  %s2 = inlined_call_operand.vmem [shape: f32[4,16,48], index: 2, kind: input, shape index: {}]
  %s3 = inlined_call_operand.vmem [shape: f32[5,16,1], index: 3, kind: input, shape index: {}]
  %s4 = inlined_call_operand.vmem [shape: f32[16,5], index: 4, kind: input, shape index: {}]
  %s5 = inlined_call_operand.vmem [shape: f32[1,5], index: 5, kind: input, shape index: {}]
  %s6 = inlined_call_operand.vmem [shape: f32[2,24], index: 6, kind: input, shape index: {}]
  %s7 = inlined_call_operand.vmem [shape: f32[1,24], index: 7, kind: input, shape index: {}]
  %s8 = inlined_call_operand.hbm [shape: f32[2,5], index: 8, kind: output, shape index: {}]
  %s9 = sld [smem:[#allocation0]]
  $region42: #{resnet_forward.1} parent=0
    _
  %s11 = ssub.s32 1, %s9
  %s12 = scalar_select 0, %s11, %s9
  $region1: #{resnet_forward.1} parent=0
    #allocation4 [shape = 'u8[1024]{0}', space=vmem, size = 0x400, scoped, tag = 'output window, operand 0, single buffered']
    #allocation5 [shape = 's32[1]{0}', space=sflag, size = 0x4, scoped, tag = 'scoped memory for resnet_forward.1']
    %13 = vsyncpa [#allocation5], 0
    // Predicated region
    $region2: #{resnet_forward.1} parent=1 // pred_check
      _
    $region3: #{resnet_forward.1} parent=1 // pred_check_branch
      %15 = sbr.rel (0) target = $region5
    $region4: #{resnet_forward.1} parent=1 // pred_region
      _
    $region5: #{resnet_forward.1} parent=1 // pred_fallthru
      _
    // Predicated region
    $region6: #{resnet_forward.1} parent=1 // pred_check
      _
    $region7: #{resnet_forward.1} parent=1 // pred_check_branch
      %17 = sbr.rel (0) target = $region9
    $region8: #{resnet_forward.1} parent=1 // pred_region
      _
    $region9: #{resnet_forward.1} parent=1 // pred_fallthru
      _
    // Predicated region
    $region10: #{resnet_forward.1} parent=1 // pred_check
      _
    $region11: #{resnet_forward.1} parent=1 // pred_check_branch
      %19 = sbr.rel (0) target = $region13
    $region12: #{resnet_forward.1} parent=1 // pred_region
      _
    $region13: #{resnet_forward.1} parent=1 // pred_fallthru
      _
    // Predicated region
    $region14: #{resnet_forward.1} parent=1 // pred_check
      _
    $region15: #{resnet_forward.1} parent=1 // pred_check_branch
      %21 = sbr.rel (0) target = $region17
    $region16: #{resnet_forward.1} parent=1 // pred_region
      _
    $region17: #{resnet_forward.1} parent=1 // pred_fallthru
      _
    // Predicated region
    $region18: #{resnet_forward.1} parent=1 // pred_check
      _
    $region19: #{resnet_forward.1} parent=1 // pred_check_branch
      %23 = sbr.rel (0) target = $region21
    $region20: #{resnet_forward.1} parent=1 // pred_region
      _
    $region21: #{resnet_forward.1} parent=1 // pred_fallthru
      _
    // Predicated region
    $region22: #{resnet_forward.1} parent=1 // pred_check
      _
    $region23: #{resnet_forward.1} parent=1 // pred_check_branch
      %25 = sbr.rel (0) target = $region25
    $region24: #{resnet_forward.1} parent=1 // pred_region
      _
    $region25: #{resnet_forward.1} parent=1 // pred_fallthru
      _
    // Predicated region
    $region26: #{resnet_forward.1} parent=1 // pred_check
      _
    $region27: #{resnet_forward.1} parent=1 // pred_check_branch
      %27 = sbr.rel (0) target = $region29
    $region28: #{resnet_forward.1} parent=1 // pred_region
      _
    $region29: #{resnet_forward.1} parent=1 // pred_fallthru
      _
    // Predicated region
    $region30: #{resnet_forward.1} parent=1 // pred_check
      _
    $region31: #{resnet_forward.1} parent=1 // pred_check_branch
      %29 = sbr.rel (0) target = $region33
    $region32: #{resnet_forward.1} parent=1 // pred_region
      _
    $region33: #{resnet_forward.1} parent=1 // pred_fallthru
      _
    %v30 = vld [vmem:[%s7] sm:$0x1]
    %v31 = vld [vmem:[%s1] sm:$0xff]
    %v32 = vld [vmem:[%s1 + $0x8] sm:$0xff]
    %v33 = vld [vmem:[%s0] sm:$0xff]
    %v34 = vld [vmem:[%s0 + $0x8] sm:$0xf]
    %v35 = vld [vmem:[%s3] sm:$0xff]
    %v36 = vld [vmem:[%s3 + $0x8] sm:$0xff]
    %38 = vset.pattern.permute.xlu0 0
    %39 = vperm.xlu0 %38, %v35
    %v40 = vpop.permute.xlu0 %39
    %43 = vset.pattern.permute.xlu0 0
    %44 = vperm.xlu0 %43, %v36
    %v45 = vpop.permute.xlu0 %44
    %vm47 = vcmask 97280
    %v49 = vsel %vm47, %v31, 0
    %v52 = vsel %vm47, %v32, 0
    %vm54 = vcmask 1043456
    %v56 = vsel %vm54, %v34, 0
    %58 = vmatprep.subr.mxu0 0.0
    %59 = vmatpush1.msra.mxu0 %v33
    %60 = vmatprep.subr.mxu0 0.0
    %61 = vmatpush1.msra.mxu0 %v56
    %62 = vmatprep.subr.mxu0 0.0
    %63 = vmatpush1.msra.mxu0 0.0
    %64 = vmatprep.subr.mxu0 0.0
    %65 = vmatpush1.msra.mxu0 0.0
    %66 = vmatprep.subr.mxu0 0.0
    %67 = vmatpush1.msra.mxu0 0.0
    %68 = vmatprep.subr.mxu0 0.0
    %69 = vmatpush1.msra.mxu0 0.0
    %70 = vmatprep.subr.mxu0 0.0
    %71 = vmatpush1.msra.mxu0 0.0
    %72 = vmatprep.subr.mxu0 0.0
    %73 = vmatpush1.msra.mxu0 0.0
    %74 = vmatprep.subr.mxu0 0.0
    %75 = vmatpush1.msra.mxu0 0.0
    %76 = vmatprep.subr.mxu0 0.0
    %77 = vmatpush1.msra.mxu0 0.0
    %78 = vmatprep.subr.mxu0 0.0
    %79 = vmatpush1.msra.mxu0 0.0
    %80 = vmatprep.subr.mxu0 0.0
    %81 = vmatpush1.msra.mxu0 0.0
    %82 = vmatprep.subr.mxu0 0.0
    %83 = vmatpush1.msra.mxu0 0.0
    %84 = vmatprep.subr.mxu0 0.0
    %85 = vmatpush1.msra.mxu0 0.0
    %86 = vmatprep.subr.mxu0 0.0
    %87 = vmatpush1.msra.mxu0 0.0
    %88 = vmatprep.subr.mxu0 0.0
    %89 = vmatpush1.msra.mxu0 0.0
    %90 = vmatprep.subr.mxu0 0.0
    %91 = vmatpush1.msra.mxu0 0.0
    %92 = vmatprep.subr.mxu0 0.0
    %93 = vmatpush1.msra.mxu0 0.0
    %94 = vmatprep.subr.mxu0 0.0
    %95 = vmatpush1.msra.mxu0 0.0
    %96 = vmatprep.subr.mxu0 0.0
    %97 = vmatpush1.msra.mxu0 0.0
    %98 = vmatprep.subr.mxu0 0.0
    %99 = vmatpush1.msra.mxu0 0.0
    %100 = vmatprep.subr.mxu0 0.0
    %101 = vmatpush1.msra.mxu0 0.0
    %102 = vmatprep.subr.mxu0 0.0
    %103 = vmatpush1.msra.mxu0 0.0
    %104 = vmatprep.subr.mxu0 0.0
    %105 = vmatpush1.msra.mxu0 0.0
    %106 = vmatprep.subr.mxu0 0.0
    %107 = vmatpush1.msra.mxu0 0.0
    %108 = vmatprep.subr.mxu0 0.0
    %109 = vmatpush1.msra.mxu0 0.0
    %110 = vmatprep.subr.mxu0 0.0
    %111 = vmatpush1.msra.mxu0 0.0
    %112 = vmatprep.subr.mxu0 0.0
    %113 = vmatpush1.msra.mxu0 0.0
    %114 = vmatprep.subr.mxu0 0.0
    %115 = vmatpush1.msra.mxu0 0.0
    %116 = vmatprep.subr.mxu0 0.0
    %117 = vmatpush1.msra.mxu0 0.0
    %118 = vmatprep.subr.mxu0 0.0
    %119 = vmatpush1.msra.mxu0 0.0
    %120 = vmatprep.subr.mxu0 0.0
    %121 = vmatpush1.msra.mxu0 0.0
    %122 = vmatprep.mubr.f32.mxu0 0.0
    %123 = vmatmul.mubr.f32.gmra.mrb[0].mxu0 %v49
    %v124 = vpop.f32.mrb[0].mxu0
    %v125 = vadd.f32 %v40, %v124
    %v126 = vpop.f32.mrb[0].mxu0
    %127 = vmatprep.mubr.f32.mxu0 0.0
    %128 = vmatmul.mubr.f32.gmra.mrb[0].mxu0 %v52
    %v129 = vpop.f32.mrb[0].mxu0
    %v130 = vadd.f32 %v45, %v129
    %v131 = vpop.f32.mrb[0].mxu0
    %132 = vdwg.mxu0
    %v133 = vmax.f32 %v125, 0.0
    %v134 = vmax.f32 %v130, 0.0
    %v136 = vlaneseq
    %v137 = vshrl.u32 %v136, 7
    %v138 = vsub.s32 0, %v137
    %v139 = vrot.slane %v30, %v138
    %v141 = vmul.f32 %v133, %v139
    %v142 = vmul.f32 %v134, %v139
    %vm143 = vcmask 195584
    %144 = vst.msk [vmem:[#allocation2] sm:$0xff] %vm143, %v141
    %145 = vst.msk [vmem:[#allocation2 + $0x8] sm:$0xff] %vm143, %v142
    %v146 = vld [vmem:[%s2] sm:$0xff]
    %v147 = vld [vmem:[%s2 + $0x8] sm:$0xff]
    %s148 = scalar_lea.vmem %s3, 16
    %v149 = vld [vmem:[%s148] sm:$0xff]
    %v150 = vld [vmem:[%s148 + $0x8] sm:$0xff]
    %vm151 = vcmask 179200
    %152 = vst.msk [vmem:[#allocation3] sm:$0xff] %vm151, %v141
    %153 = vst.msk [vmem:[#allocation3 + $0x8] sm:$0xff] %vm151, %v142
    %156 = vrot.lane.b32.xlu0 %v141, 127
    %v157 = vpop.permute.xlu0 %156
    %158 = vrot.lane.b32.xlu0 %v142, 127
    %v159 = vpop.permute.xlu0 %158
    %162 = vst.msk [vmem:[#allocation3 + $0x10] sm:$0xff] %vm151, %v157
    %163 = vst.msk [vmem:[#allocation3 + $0x18] sm:$0xff] %vm151, %v159
    %164 = vrot.lane.b32.xlu0 %v141, 126
    %v165 = vpop.permute.xlu0 %164
    %166 = vrot.lane.b32.xlu0 %v142, 126
    %v167 = vpop.permute.xlu0 %166
    %170 = vst.msk [vmem:[#allocation3 + $0x20] sm:$0xff] %vm151, %v165
    %171 = vst.msk [vmem:[#allocation3 + $0x28] sm:$0xff] %vm151, %v167
    %v172 = vld [vmem:[#allocation3] sm:$0xff]
    %v173 = vld [vmem:[#allocation3 + $0x8] sm:$0xff]
    %v174 = vld [vmem:[#allocation3 + $0x10] sm:$0xff]
    %v175 = vld [vmem:[#allocation3 + $0x18] sm:$0xff]
    %v176 = vld [vmem:[#allocation3 + $0x20] sm:$0xff]
    %v177 = vld [vmem:[#allocation3 + $0x28] sm:$0xff]
    %179 = vset.pattern.permute.xlu0 0
    %180 = vperm.xlu0 %179, %v149
    %v181 = vpop.permute.xlu0 %180
    %184 = vset.pattern.permute.xlu0 0
    %185 = vperm.xlu0 %184, %v150
    %v186 = vpop.permute.xlu0 %185
    %vm188 = vcmask 392192
    %v190 = vsel %vm188, %v146, 0
    %v193 = vsel %vm188, %v147, 0
    %195 = vmatprep.subr.mxu0 0.0
    %196 = vmatpush1.msra.mxu0 %v172
    %197 = vmatprep.subr.mxu0 0.0
    %198 = vmatpush1.msra.mxu0 %v173
    %199 = vmatprep.subr.mxu0 0.0
    %200 = vmatpush1.msra.mxu0 %v174
    %201 = vmatprep.subr.mxu0 0.0
    %202 = vmatpush1.msra.mxu0 %v175
    %203 = vmatprep.subr.mxu0 0.0
    %204 = vmatpush1.msra.mxu0 %v176
    %205 = vmatprep.subr.mxu0 0.0
    %206 = vmatpush1.msra.mxu0 %v177
    %207 = vmatprep.subr.mxu0 0.0
    %208 = vmatpush1.msra.mxu0 0.0
    %209 = vmatprep.subr.mxu0 0.0
    %210 = vmatpush1.msra.mxu0 0.0
    %211 = vmatprep.subr.mxu0 0.0
    %212 = vmatpush1.msra.mxu0 0.0
    %213 = vmatprep.subr.mxu0 0.0
    %214 = vmatpush1.msra.mxu0 0.0
    %215 = vmatprep.subr.mxu0 0.0
    %216 = vmatpush1.msra.mxu0 0.0
    %217 = vmatprep.subr.mxu0 0.0
    %218 = vmatpush1.msra.mxu0 0.0
    %219 = vmatprep.subr.mxu0 0.0
    %220 = vmatpush1.msra.mxu0 0.0
    %221 = vmatprep.subr.mxu0 0.0
    %222 = vmatpush1.msra.mxu0 0.0
    %223 = vmatprep.subr.mxu0 0.0
    %224 = vmatpush1.msra.mxu0 0.0
    %225 = vmatprep.subr.mxu0 0.0
    %226 = vmatpush1.msra.mxu0 0.0
    %227 = vmatprep.subr.mxu0 0.0
    %228 = vmatpush1.msra.mxu0 0.0
    %229 = vmatprep.subr.mxu0 0.0
    %230 = vmatpush1.msra.mxu0 0.0
    %231 = vmatprep.subr.mxu0 0.0
    %232 = vmatpush1.msra.mxu0 0.0
    %233 = vmatprep.subr.mxu0 0.0
    %234 = vmatpush1.msra.mxu0 0.0
    %235 = vmatprep.subr.mxu0 0.0
    %236 = vmatpush1.msra.mxu0 0.0
    %237 = vmatprep.subr.mxu0 0.0
    %238 = vmatpush1.msra.mxu0 0.0
    %239 = vmatprep.subr.mxu0 0.0
    %240 = vmatpush1.msra.mxu0 0.0
    %241 = vmatprep.subr.mxu0 0.0
    %242 = vmatpush1.msra.mxu0 0.0
    %243 = vmatprep.subr.mxu0 0.0
    %244 = vmatpush1.msra.mxu0 0.0
    %245 = vmatprep.subr.mxu0 0.0
    %246 = vmatpush1.msra.mxu0 0.0
    %247 = vmatprep.subr.mxu0 0.0
    %248 = vmatpush1.msra.mxu0 0.0
    %249 = vmatprep.subr.mxu0 0.0
    %250 = vmatpush1.msra.mxu0 0.0
    %251 = vmatprep.subr.mxu0 0.0
    %252 = vmatpush1.msra.mxu0 0.0
    %253 = vmatprep.subr.mxu0 0.0
    %254 = vmatpush1.msra.mxu0 0.0
    %255 = vmatprep.subr.mxu0 0.0
    %256 = vmatpush1.msra.mxu0 0.0
    %257 = vmatprep.subr.mxu0 0.0
    %258 = vmatpush1.msra.mxu0 0.0
    %259 = vmatprep.mubr.f32.mxu0 0.0
    %260 = vmatmul.mubr.f32.gmra.mrb[0].mxu0 %v190
    %v261 = vpop.f32.mrb[0].mxu0
    %v262 = vadd.f32 %v181, %v261
    %v263 = vpop.f32.mrb[0].mxu0
    %264 = vmatprep.mubr.f32.mxu0 0.0
    %265 = vmatmul.mubr.f32.gmra.mrb[0].mxu0 %v193
    %v266 = vpop.f32.mrb[0].mxu0
    %v267 = vadd.f32 %v186, %v266
    %v268 = vpop.f32.mrb[0].mxu0
    %269 = vdwg.mxu0
    %v270 = vmax.f32 %v262, 0.0
    %v271 = vmax.f32 %v267, 0.0
    %272 = vrot.lane.b32.xlu0 %v139, 127
    %v273 = vpop.permute.xlu0 %272
    %v275 = vmul.f32 %v270, %v273
    %v276 = vmul.f32 %v271, %v273
    %279 = vrot.lane.b32.xlu0 %v275, 1
    %v280 = vpop.permute.xlu0 %279
    %281 = vrot.lane.b32.xlu0 %v276, 1
    %v282 = vpop.permute.xlu0 %281
    %vm285 = vcmask 187400
    %286 = vst.msk [vmem:[#allocation2] sm:$0xff] %vm285, %v280
    %287 = vst.msk [vmem:[#allocation2 + $0x8] sm:$0xff] %vm285, %v282
    %v288 = vld [vmem:[#allocation2] sm:$0xff]
    %v289 = vld [vmem:[#allocation2 + $0x8] sm:$0xff]
    %s290 = scalar_lea.vmem %s2, 16
    %v291 = vld [vmem:[%s290] sm:$0xff]
    %v292 = vld [vmem:[%s290 + $0x8] sm:$0xff]
    %s293 = scalar_lea.vmem %s3, 32
    %v294 = vld [vmem:[%s293] sm:$0xff]
    %v295 = vld [vmem:[%s293 + $0x8] sm:$0xff]
    %296 = vst.msk [vmem:[#allocation3] sm:$0xff] %vm151, %v288
    %297 = vst.msk [vmem:[#allocation3 + $0x8] sm:$0xff] %vm151, %v289
    %300 = vrot.lane.b32.xlu0 %v288, 127
    %v301 = vpop.permute.xlu0 %300
    %302 = vrot.lane.b32.xlu0 %v289, 127
    %v303 = vpop.permute.xlu0 %302
    %306 = vst.msk [vmem:[#allocation3 + $0x10] sm:$0xff] %vm151, %v301
    %307 = vst.msk [vmem:[#allocation3 + $0x18] sm:$0xff] %vm151, %v303
    %308 = vrot.lane.b32.xlu0 %v288, 126
    %v309 = vpop.permute.xlu0 %308
    %310 = vrot.lane.b32.xlu0 %v289, 126
    %v311 = vpop.permute.xlu0 %310
    %314 = vst.msk [vmem:[#allocation3 + $0x20] sm:$0xff] %vm151, %v309
    %315 = vst.msk [vmem:[#allocation3 + $0x28] sm:$0xff] %vm151, %v311
    %v316 = vld [vmem:[#allocation3] sm:$0xff]
    %v317 = vld [vmem:[#allocation3 + $0x8] sm:$0xff]
    %v318 = vld [vmem:[#allocation3 + $0x10] sm:$0xff]
    %v319 = vld [vmem:[#allocation3 + $0x18] sm:$0xff]
    %v320 = vld [vmem:[#allocation3 + $0x20] sm:$0xff]
    %v321 = vld [vmem:[#allocation3 + $0x28] sm:$0xff]
    %323 = vset.pattern.permute.xlu0 0
    %324 = vperm.xlu0 %323, %v294
    %v325 = vpop.permute.xlu0 %324
    %328 = vset.pattern.permute.xlu0 0
    %329 = vperm.xlu0 %328, %v295
    %v330 = vpop.permute.xlu0 %329
    %v333 = vsel %vm188, %v291, 0
    %v336 = vsel %vm188, %v292, 0
    %338 = vmatprep.subr.mxu0 0.0
    %339 = vmatpush1.msra.mxu0 %v316
    %340 = vmatprep.subr.mxu0 0.0
    %341 = vmatpush1.msra.mxu0 %v317
    %342 = vmatprep.subr.mxu0 0.0
    %343 = vmatpush1.msra.mxu0 %v318
    %344 = vmatprep.subr.mxu0 0.0
    %345 = vmatpush1.msra.mxu0 %v319
    %346 = vmatprep.subr.mxu0 0.0
    %347 = vmatpush1.msra.mxu0 %v320
    %348 = vmatprep.subr.mxu0 0.0
    %349 = vmatpush1.msra.mxu0 %v321
    %350 = vmatprep.subr.mxu0 0.0
    %351 = vmatpush1.msra.mxu0 0.0
    %352 = vmatprep.subr.mxu0 0.0
    %353 = vmatpush1.msra.mxu0 0.0
    %354 = vmatprep.subr.mxu0 0.0
    %355 = vmatpush1.msra.mxu0 0.0
    %356 = vmatprep.subr.mxu0 0.0
    %357 = vmatpush1.msra.mxu0 0.0
    %358 = vmatprep.subr.mxu0 0.0
    %359 = vmatpush1.msra.mxu0 0.0
    %360 = vmatprep.subr.mxu0 0.0
    %361 = vmatpush1.msra.mxu0 0.0
    %362 = vmatprep.subr.mxu0 0.0
    %363 = vmatpush1.msra.mxu0 0.0
    %364 = vmatprep.subr.mxu0 0.0
    %365 = vmatpush1.msra.mxu0 0.0
    %366 = vmatprep.subr.mxu0 0.0
    %367 = vmatpush1.msra.mxu0 0.0
    %368 = vmatprep.subr.mxu0 0.0
    %369 = vmatpush1.msra.mxu0 0.0
    %370 = vmatprep.subr.mxu0 0.0
    %371 = vmatpush1.msra.mxu0 0.0
    %372 = vmatprep.subr.mxu0 0.0
    %373 = vmatpush1.msra.mxu0 0.0
    %374 = vmatprep.subr.mxu0 0.0
    %375 = vmatpush1.msra.mxu0 0.0
    %376 = vmatprep.subr.mxu0 0.0
    %377 = vmatpush1.msra.mxu0 0.0
    %378 = vmatprep.subr.mxu0 0.0
    %379 = vmatpush1.msra.mxu0 0.0
    %380 = vmatprep.subr.mxu0 0.0
    %381 = vmatpush1.msra.mxu0 0.0
    %382 = vmatprep.subr.mxu0 0.0
    %383 = vmatpush1.msra.mxu0 0.0
    %384 = vmatprep.subr.mxu0 0.0
    %385 = vmatpush1.msra.mxu0 0.0
    %386 = vmatprep.subr.mxu0 0.0
    %387 = vmatpush1.msra.mxu0 0.0
    %388 = vmatprep.subr.mxu0 0.0
    %389 = vmatpush1.msra.mxu0 0.0
    %390 = vmatprep.subr.mxu0 0.0
    %391 = vmatpush1.msra.mxu0 0.0
    %392 = vmatprep.subr.mxu0 0.0
    %393 = vmatpush1.msra.mxu0 0.0
    %394 = vmatprep.subr.mxu0 0.0
    %395 = vmatpush1.msra.mxu0 0.0
    %396 = vmatprep.subr.mxu0 0.0
    %397 = vmatpush1.msra.mxu0 0.0
    %398 = vmatprep.subr.mxu0 0.0
    %399 = vmatpush1.msra.mxu0 0.0
    %400 = vmatprep.subr.mxu0 0.0
    %401 = vmatpush1.msra.mxu0 0.0
    %402 = vmatprep.mubr.f32.mxu0 0.0
    %403 = vmatmul.mubr.f32.gmra.mrb[0].mxu0 %v333
    %v404 = vpop.f32.mrb[0].mxu0
    %v405 = vadd.f32 %v325, %v404
    %v406 = vpop.f32.mrb[0].mxu0
    %407 = vmatprep.mubr.f32.mxu0 0.0
    %408 = vmatmul.mubr.f32.gmra.mrb[0].mxu0 %v336
    %v409 = vpop.f32.mrb[0].mxu0
    %v410 = vadd.f32 %v330, %v409
    %v411 = vpop.f32.mrb[0].mxu0
    %412 = vdwg.mxu0
    %v413 = vadd.f32 %v405, %v157
    %v414 = vadd.f32 %v410, %v159
    %v415 = vmax.f32 %v413, 0.0
    %v416 = vmax.f32 %v414, 0.0
    %v417 = vmul.f32 %v415, %v273
    %v418 = vmul.f32 %v416, %v273
    %421 = vrot.lane.b32.xlu0 %v417, 1
    %v422 = vpop.permute.xlu0 %421
    %423 = vrot.lane.b32.xlu0 %v418, 1
    %v424 = vpop.permute.xlu0 %423
    %427 = vst.msk [vmem:[#allocation2] sm:$0xff] %vm285, %v422
    %428 = vst.msk [vmem:[#allocation2 + $0x8] sm:$0xff] %vm285, %v424
    %v429 = vld [vmem:[#allocation2] sm:$0xff]
    %v430 = vld [vmem:[#allocation2 + $0x8] sm:$0xff]
    %s431 = scalar_lea.vmem %s2, 32
    %v432 = vld [vmem:[%s431] sm:$0xff]
    %v433 = vld [vmem:[%s431 + $0x8] sm:$0xff]
    %s434 = scalar_lea.vmem %s3, 48
    %v435 = vld [vmem:[%s434] sm:$0xff]
    %v436 = vld [vmem:[%s434 + $0x8] sm:$0xff]
    %437 = vst.msk [vmem:[#allocation3] sm:$0xff] %vm151, %v429
    %438 = vst.msk [vmem:[#allocation3 + $0x8] sm:$0xff] %vm151, %v430
    %441 = vrot.lane.b32.xlu0 %v429, 127
    %v442 = vpop.permute.xlu0 %441
    %443 = vrot.lane.b32.xlu0 %v430, 127
    %v444 = vpop.permute.xlu0 %443
    %447 = vst.msk [vmem:[#allocation3 + $0x10] sm:$0xff] %vm151, %v442
    %448 = vst.msk [vmem:[#allocation3 + $0x18] sm:$0xff] %vm151, %v444
    %449 = vrot.lane.b32.xlu0 %v429, 126
    %v450 = vpop.permute.xlu0 %449
    %451 = vrot.lane.b32.xlu0 %v430, 126
    %v452 = vpop.permute.xlu0 %451
    %455 = vst.msk [vmem:[#allocation3 + $0x20] sm:$0xff] %vm151, %v450
    %456 = vst.msk [vmem:[#allocation3 + $0x28] sm:$0xff] %vm151, %v452
    %v457 = vld [vmem:[#allocation3] sm:$0xff]
    %v458 = vld [vmem:[#allocation3 + $0x8] sm:$0xff]
    %v459 = vld [vmem:[#allocation3 + $0x10] sm:$0xff]
    %v460 = vld [vmem:[#allocation3 + $0x18] sm:$0xff]
    %v461 = vld [vmem:[#allocation3 + $0x20] sm:$0xff]
    %v462 = vld [vmem:[#allocation3 + $0x28] sm:$0xff]
    %464 = vset.pattern.permute.xlu0 0
    %465 = vperm.xlu0 %464, %v435
    %v466 = vpop.permute.xlu0 %465
    %469 = vset.pattern.permute.xlu0 0
    %470 = vperm.xlu0 %469, %v436
    %v471 = vpop.permute.xlu0 %470
    %v474 = vsel %vm188, %v432, 0
    %v477 = vsel %vm188, %v433, 0
    %479 = vmatprep.subr.mxu0 0.0
    %480 = vmatpush1.msra.mxu0 %v457
    %481 = vmatprep.subr.mxu0 0.0
    %482 = vmatpush1.msra.mxu0 %v458
    %483 = vmatprep.subr.mxu0 0.0
    %484 = vmatpush1.msra.mxu0 %v459
    %485 = vmatprep.subr.mxu0 0.0
    %486 = vmatpush1.msra.mxu0 %v460
    %487 = vmatprep.subr.mxu0 0.0
    %488 = vmatpush1.msra.mxu0 %v461
    %489 = vmatprep.subr.mxu0 0.0
    %490 = vmatpush1.msra.mxu0 %v462
    %491 = vmatprep.subr.mxu0 0.0
    %492 = vmatpush1.msra.mxu0 0.0
    %493 = vmatprep.subr.mxu0 0.0
    %494 = vmatpush1.msra.mxu0 0.0
    %495 = vmatprep.subr.mxu0 0.0
    %496 = vmatpush1.msra.mxu0 0.0
    %497 = vmatprep.subr.mxu0 0.0
    %498 = vmatpush1.msra.mxu0 0.0
    %499 = vmatprep.subr.mxu0 0.0
    %500 = vmatpush1.msra.mxu0 0.0
    %501 = vmatprep.subr.mxu0 0.0
    %502 = vmatpush1.msra.mxu0 0.0
    %503 = vmatprep.subr.mxu0 0.0
    %504 = vmatpush1.msra.mxu0 0.0
    %505 = vmatprep.subr.mxu0 0.0
    %506 = vmatpush1.msra.mxu0 0.0
    %507 = vmatprep.subr.mxu0 0.0
    %508 = vmatpush1.msra.mxu0 0.0
    %509 = vmatprep.subr.mxu0 0.0
    %510 = vmatpush1.msra.mxu0 0.0
    %511 = vmatprep.subr.mxu0 0.0
    %512 = vmatpush1.msra.mxu0 0.0
    %513 = vmatprep.subr.mxu0 0.0
    %514 = vmatpush1.msra.mxu0 0.0
    %515 = vmatprep.subr.mxu0 0.0
    %516 = vmatpush1.msra.mxu0 0.0
    %517 = vmatprep.subr.mxu0 0.0
    %518 = vmatpush1.msra.mxu0 0.0
    %519 = vmatprep.subr.mxu0 0.0
    %520 = vmatpush1.msra.mxu0 0.0
    %521 = vmatprep.subr.mxu0 0.0
    %522 = vmatpush1.msra.mxu0 0.0
    %523 = vmatprep.subr.mxu0 0.0
    %524 = vmatpush1.msra.mxu0 0.0
    %525 = vmatprep.subr.mxu0 0.0
    %526 = vmatpush1.msra.mxu0 0.0
    %527 = vmatprep.subr.mxu0 0.0
    %528 = vmatpush1.msra.mxu0 0.0
    %529 = vmatprep.subr.mxu0 0.0
    %530 = vmatpush1.msra.mxu0 0.0
    %531 = vmatprep.subr.mxu0 0.0
    %532 = vmatpush1.msra.mxu0 0.0
    %533 = vmatprep.subr.mxu0 0.0
    %534 = vmatpush1.msra.mxu0 0.0
    %535 = vmatprep.subr.mxu0 0.0
    %536 = vmatpush1.msra.mxu0 0.0
    %537 = vmatprep.subr.mxu0 0.0
    %538 = vmatpush1.msra.mxu0 0.0
    %539 = vmatprep.subr.mxu0 0.0
    %540 = vmatpush1.msra.mxu0 0.0
    %541 = vmatprep.subr.mxu0 0.0
    %542 = vmatpush1.msra.mxu0 0.0
    %543 = vmatprep.mubr.f32.mxu0 0.0
    %544 = vmatmul.mubr.f32.gmra.mrb[0].mxu0 %v474
    %v545 = vpop.f32.mrb[0].mxu0
    %v546 = vadd.f32 %v466, %v545
    %v547 = vpop.f32.mrb[0].mxu0
    %548 = vmatprep.mubr.f32.mxu0 0.0
    %549 = vmatmul.mubr.f32.gmra.mrb[0].mxu0 %v477
    %v550 = vpop.f32.mrb[0].mxu0
    %v551 = vadd.f32 %v471, %v550
    %v552 = vpop.f32.mrb[0].mxu0
    %553 = vdwg.mxu0
    %v554 = vmax.f32 %v546, 0.0
    %v555 = vmax.f32 %v551, 0.0
    %v556 = vmul.f32 %v554, %v273
    %v557 = vmul.f32 %v555, %v273
    %560 = vrot.lane.b32.xlu0 %v556, 1
    %v561 = vpop.permute.xlu0 %560
    %562 = vrot.lane.b32.xlu0 %v557, 1
    %v563 = vpop.permute.xlu0 %562
    %566 = vst.msk [vmem:[#allocation2] sm:$0xff] %vm285, %v561
    %567 = vst.msk [vmem:[#allocation2 + $0x8] sm:$0xff] %vm285, %v563
    %v568 = vld [vmem:[#allocation2] sm:$0xff]
    %v569 = vld [vmem:[#allocation2 + $0x8] sm:$0xff]
    %s570 = scalar_lea.vmem %s2, 48
    %v571 = vld [vmem:[%s570] sm:$0xff]
    %v572 = vld [vmem:[%s570 + $0x8] sm:$0xff]
    %s573 = scalar_lea.vmem %s3, 64
    %v574 = vld [vmem:[%s573] sm:$0xff]
    %v575 = vld [vmem:[%s573 + $0x8] sm:$0xff]
    %576 = vst.msk [vmem:[#allocation3] sm:$0xff] %vm151, %v568
    %577 = vst.msk [vmem:[#allocation3 + $0x8] sm:$0xff] %vm151, %v569
    %580 = vrot.lane.b32.xlu0 %v568, 127
    %v581 = vpop.permute.xlu0 %580
    %582 = vrot.lane.b32.xlu0 %v569, 127
    %v583 = vpop.permute.xlu0 %582
    %586 = vst.msk [vmem:[#allocation3 + $0x10] sm:$0xff] %vm151, %v581
    %587 = vst.msk [vmem:[#allocation3 + $0x18] sm:$0xff] %vm151, %v583
    %588 = vrot.lane.b32.xlu0 %v568, 126
    %v589 = vpop.permute.xlu0 %588
    %590 = vrot.lane.b32.xlu0 %v569, 126
    %v591 = vpop.permute.xlu0 %590
    %594 = vst.msk [vmem:[#allocation3 + $0x20] sm:$0xff] %vm151, %v589
    %595 = vst.msk [vmem:[#allocation3 + $0x28] sm:$0xff] %vm151, %v591
    %v596 = vld [vmem:[#allocation3] sm:$0xff]
    %v597 = vld [vmem:[#allocation3 + $0x8] sm:$0xff]
    %v598 = vld [vmem:[#allocation3 + $0x10] sm:$0xff]
    %v599 = vld [vmem:[#allocation3 + $0x18] sm:$0xff]
    %v600 = vld [vmem:[#allocation3 + $0x20] sm:$0xff]
    %v601 = vld [vmem:[#allocation3 + $0x28] sm:$0xff]
    %603 = vset.pattern.permute.xlu0 0
    %604 = vperm.xlu0 %603, %v574
    %v605 = vpop.permute.xlu0 %604
    %608 = vset.pattern.permute.xlu0 0
    %609 = vperm.xlu0 %608, %v575
    %v610 = vpop.permute.xlu0 %609
    %v613 = vsel %vm188, %v571, 0
    %v616 = vsel %vm188, %v572, 0
    %618 = vmatprep.subr.mxu0 0.0
    %619 = vmatpush1.msra.mxu0 %v596
    %620 = vmatprep.subr.mxu0 0.0
    %621 = vmatpush1.msra.mxu0 %v597
    %622 = vmatprep.subr.mxu0 0.0
    %623 = vmatpush1.msra.mxu0 %v598
    %624 = vmatprep.subr.mxu0 0.0
    %625 = vmatpush1.msra.mxu0 %v599
    %626 = vmatprep.subr.mxu0 0.0
    %627 = vmatpush1.msra.mxu0 %v600
    %628 = vmatprep.subr.mxu0 0.0
    %629 = vmatpush1.msra.mxu0 %v601
    %630 = vmatprep.subr.mxu0 0.0
    %631 = vmatpush1.msra.mxu0 0.0
    %632 = vmatprep.subr.mxu0 0.0
    %633 = vmatpush1.msra.mxu0 0.0
    %634 = vmatprep.subr.mxu0 0.0
    %635 = vmatpush1.msra.mxu0 0.0
    %636 = vmatprep.subr.mxu0 0.0
    %637 = vmatpush1.msra.mxu0 0.0
    %638 = vmatprep.subr.mxu0 0.0
    %639 = vmatpush1.msra.mxu0 0.0
    %640 = vmatprep.subr.mxu0 0.0
    %641 = vmatpush1.msra.mxu0 0.0
    %642 = vmatprep.subr.mxu0 0.0
    %643 = vmatpush1.msra.mxu0 0.0
    %644 = vmatprep.subr.mxu0 0.0
    %645 = vmatpush1.msra.mxu0 0.0
    %646 = vmatprep.subr.mxu0 0.0
    %647 = vmatpush1.msra.mxu0 0.0
    %648 = vmatprep.subr.mxu0 0.0
    %649 = vmatpush1.msra.mxu0 0.0
    %650 = vmatprep.subr.mxu0 0.0
    %651 = vmatpush1.msra.mxu0 0.0
    %652 = vmatprep.subr.mxu0 0.0
    %653 = vmatpush1.msra.mxu0 0.0
    %654 = vmatprep.subr.mxu0 0.0
    %655 = vmatpush1.msra.mxu0 0.0
    %656 = vmatprep.subr.mxu0 0.0
    %657 = vmatpush1.msra.mxu0 0.0
    %658 = vmatprep.subr.mxu0 0.0
    %659 = vmatpush1.msra.mxu0 0.0
    %660 = vmatprep.subr.mxu0 0.0
    %661 = vmatpush1.msra.mxu0 0.0
    %662 = vmatprep.subr.mxu0 0.0
    %663 = vmatpush1.msra.mxu0 0.0
    %664 = vmatprep.subr.mxu0 0.0
    %665 = vmatpush1.msra.mxu0 0.0
    %666 = vmatprep.subr.mxu0 0.0
    %667 = vmatpush1.msra.mxu0 0.0
    %668 = vmatprep.subr.mxu0 0.0
    %669 = vmatpush1.msra.mxu0 0.0
    %670 = vmatprep.subr.mxu0 0.0
    %671 = vmatpush1.msra.mxu0 0.0
    %672 = vmatprep.subr.mxu0 0.0
    %673 = vmatpush1.msra.mxu0 0.0
    %674 = vmatprep.subr.mxu0 0.0
    %675 = vmatpush1.msra.mxu0 0.0
    %676 = vmatprep.subr.mxu0 0.0
    %677 = vmatpush1.msra.mxu0 0.0
    %678 = vmatprep.subr.mxu0 0.0
    %679 = vmatpush1.msra.mxu0 0.0
    %680 = vmatprep.subr.mxu0 0.0
    %681 = vmatpush1.msra.mxu0 0.0
    %682 = vmatprep.mubr.f32.mxu0 0.0
    %683 = vmatmul.mubr.f32.gmra.mrb[0].mxu0 %v613
    %v684 = vpop.f32.mrb[0].mxu0
    %v685 = vadd.f32 %v605, %v684
    %v686 = vpop.f32.mrb[0].mxu0
    %687 = vmatprep.mubr.f32.mxu0 0.0
    %688 = vmatmul.mubr.f32.gmra.mrb[0].mxu0 %v616
    %v689 = vpop.f32.mrb[0].mxu0
    %v690 = vadd.f32 %v610, %v689
    %v691 = vpop.f32.mrb[0].mxu0
    %692 = vdwg.mxu0
    %v693 = vadd.f32 %v685, %v442
    %v694 = vadd.f32 %v690, %v444
    %v695 = vmax.f32 %v693, 0.0
    %v696 = vmax.f32 %v694, 0.0
    %v697 = vmul.f32 %v695, %v273
    %v698 = vmul.f32 %v696, %v273
    %701 = vrot.lane.b32.xlu0 %v697, 1
    %v702 = vpop.permute.xlu0 %701
    %703 = vrot.lane.b32.xlu0 %v698, 1
    %v704 = vpop.permute.xlu0 %703
    %707 = vst.msk [vmem:[#allocation2] sm:$0xff] %vm285, %v702
    %708 = vst.msk [vmem:[#allocation2 + $0x8] sm:$0xff] %vm285, %v704
    %v709 = vld [vmem:[#allocation2] sm:$0xff]
    %v710 = vld [vmem:[#allocation2 + $0x8] sm:$0xff]
    %v711 = vld [vmem:[%s6] sm:$0x3]
    %v713 = vsel %vm143, %v711, 0
    %v716 = vsel %vm143, %v709, 0
    %v719 = vsel %vm143, %v710, 0
    %721 = vmatprep.subr.mxu0 0.0
    %722 = vmatpush1.xpose.msra.mxu0 %v716
    %723 = vmatprep.subr.mxu0 0.0
    %724 = vmatpush1.xpose.msra.mxu0 %v719
    %725 = vmatprep.subr.mxu0 0.0
    %726 = vmatpush1.xpose.msra.mxu0 0.0
    %727 = vmatprep.subr.mxu0 0.0
    %728 = vmatpush1.xpose.msra.mxu0 0.0
    %729 = vmatprep.subr.mxu0 0.0
    %730 = vmatpush1.xpose.msra.mxu0 0.0
    %731 = vmatprep.subr.mxu0 0.0
    %732 = vmatpush1.xpose.msra.mxu0 0.0
    %733 = vmatprep.subr.mxu0 0.0
    %734 = vmatpush1.xpose.msra.mxu0 0.0
    %735 = vmatprep.subr.mxu0 0.0
    %736 = vmatpush1.xpose.msra.mxu0 0.0
    %737 = vmatprep.subr.mxu0 0.0
    %738 = vmatpush1.xpose.msra.mxu0 0.0
    %739 = vmatprep.subr.mxu0 0.0
    %740 = vmatpush1.xpose.msra.mxu0 0.0
    %741 = vmatprep.subr.mxu0 0.0
    %742 = vmatpush1.xpose.msra.mxu0 0.0
    %743 = vmatprep.subr.mxu0 0.0
    %744 = vmatpush1.xpose.msra.mxu0 0.0
    %745 = vmatprep.subr.mxu0 0.0
    %746 = vmatpush1.xpose.msra.mxu0 0.0
    %747 = vmatprep.subr.mxu0 0.0
    %748 = vmatpush1.xpose.msra.mxu0 0.0
    %749 = vmatprep.subr.mxu0 0.0
    %750 = vmatpush1.xpose.msra.mxu0 0.0
    %751 = vmatprep.subr.mxu0 0.0
    %752 = vmatpush1.xpose.msra.mxu0 0.0
    %753 = vmatprep.subr.mxu0 0.0
    %754 = vmatpush1.xpose.msra.mxu0 0.0
    %755 = vmatprep.subr.mxu0 0.0
    %756 = vmatpush1.xpose.msra.mxu0 0.0
    %757 = vmatprep.subr.mxu0 0.0
    %758 = vmatpush1.xpose.msra.mxu0 0.0
    %759 = vmatprep.subr.mxu0 0.0
    %760 = vmatpush1.xpose.msra.mxu0 0.0
    %761 = vmatprep.subr.mxu0 0.0
    %762 = vmatpush1.xpose.msra.mxu0 0.0
    %763 = vmatprep.subr.mxu0 0.0
    %764 = vmatpush1.xpose.msra.mxu0 0.0
    %765 = vmatprep.subr.mxu0 0.0
    %766 = vmatpush1.xpose.msra.mxu0 0.0
    %767 = vmatprep.subr.mxu0 0.0
    %768 = vmatpush1.xpose.msra.mxu0 0.0
    %769 = vmatprep.subr.mxu0 0.0
    %770 = vmatpush1.xpose.msra.mxu0 0.0
    %771 = vmatprep.subr.mxu0 0.0
    %772 = vmatpush1.xpose.msra.mxu0 0.0
    %773 = vmatprep.subr.mxu0 0.0
    %774 = vmatpush1.xpose.msra.mxu0 0.0
    %775 = vmatprep.subr.mxu0 0.0
    %776 = vmatpush1.xpose.msra.mxu0 0.0
    %777 = vmatprep.subr.mxu0 0.0
    %778 = vmatpush1.xpose.msra.mxu0 0.0
    %779 = vmatprep.subr.mxu0 0.0
    %780 = vmatpush1.xpose.msra.mxu0 0.0
    %781 = vmatprep.subr.mxu0 0.0
    %782 = vmatpush1.xpose.msra.mxu0 0.0
    %783 = vmatprep.subr.mxu0 0.0
    %784 = vmatpush1.xpose.msra.mxu0 0.0
    %785 = vmatprep.mubr.f32.mxu0 0.0
    %786 = vmatmul.mubr.f32.gmra.mrb[0].mxu0 %v713
    %v787 = vpop.f32.mrb[0].mxu0
    %v788 = vadd.f32 0.0, %v787
    %v789 = vpop.f32.mrb[0].mxu0
    %790 = vdwg.mxu0
    %v791 = vld [vmem:[%s4] sm:$0xff]
    %v792 = vld [vmem:[%s4 + $0x8] sm:$0xff]
    %v793 = vld [vmem:[%s5] sm:$0x1]
    %v795 = vlaneseq
    %v796 = vshrl.u32 %v795, 7
    %v797 = vsub.s32 0, %v796
    %v798 = vrot.slane %v793, %v797
    %vm800 = vcmask 130048
    %v802 = vsel %vm800, %v788, 0
    %804 = vmatprep.subr.mxu0 0.0
    %805 = vmatpush1.msra.mxu0 %v791
    %806 = vmatprep.subr.mxu0 0.0
    %807 = vmatpush1.msra.mxu0 %v792
    %808 = vmatprep.subr.mxu0 0.0
    %809 = vmatpush1.msra.mxu0 0.0
    %810 = vmatprep.subr.mxu0 0.0
    %811 = vmatpush1.msra.mxu0 0.0
    %812 = vmatprep.subr.mxu0 0.0
    %813 = vmatpush1.msra.mxu0 0.0
    %814 = vmatprep.subr.mxu0 0.0
    %815 = vmatpush1.msra.mxu0 0.0
    %816 = vmatprep.subr.mxu0 0.0
    %817 = vmatpush1.msra.mxu0 0.0
    %818 = vmatprep.subr.mxu0 0.0
    %819 = vmatpush1.msra.mxu0 0.0
    %820 = vmatprep.subr.mxu0 0.0
    %821 = vmatpush1.msra.mxu0 0.0
    %822 = vmatprep.subr.mxu0 0.0
    %823 = vmatpush1.msra.mxu0 0.0
    %824 = vmatprep.subr.mxu0 0.0
    %825 = vmatpush1.msra.mxu0 0.0
    %826 = vmatprep.subr.mxu0 0.0
    %827 = vmatpush1.msra.mxu0 0.0
    %828 = vmatprep.subr.mxu0 0.0
    %829 = vmatpush1.msra.mxu0 0.0
    %830 = vmatprep.subr.mxu0 0.0
    %831 = vmatpush1.msra.mxu0 0.0
    %832 = vmatprep.subr.mxu0 0.0
    %833 = vmatpush1.msra.mxu0 0.0
    %834 = vmatprep.subr.mxu0 0.0
    %835 = vmatpush1.msra.mxu0 0.0
    %836 = vmatprep.subr.mxu0 0.0
    %837 = vmatpush1.msra.mxu0 0.0
    %838 = vmatprep.subr.mxu0 0.0
    %839 = vmatpush1.msra.mxu0 0.0
    %840 = vmatprep.subr.mxu0 0.0
    %841 = vmatpush1.msra.mxu0 0.0
    %842 = vmatprep.subr.mxu0 0.0
    %843 = vmatpush1.msra.mxu0 0.0
    %844 = vmatprep.subr.mxu0 0.0
    %845 = vmatpush1.msra.mxu0 0.0
    %846 = vmatprep.subr.mxu0 0.0
    %847 = vmatpush1.msra.mxu0 0.0
    %848 = vmatprep.subr.mxu0 0.0
    %849 = vmatpush1.msra.mxu0 0.0
    %850 = vmatprep.subr.mxu0 0.0
    %851 = vmatpush1.msra.mxu0 0.0
    %852 = vmatprep.subr.mxu0 0.0
    %853 = vmatpush1.msra.mxu0 0.0
    %854 = vmatprep.subr.mxu0 0.0
    %855 = vmatpush1.msra.mxu0 0.0
    %856 = vmatprep.subr.mxu0 0.0
    %857 = vmatpush1.msra.mxu0 0.0
    %858 = vmatprep.subr.mxu0 0.0
    %859 = vmatpush1.msra.mxu0 0.0
    %860 = vmatprep.subr.mxu0 0.0
    %861 = vmatpush1.msra.mxu0 0.0
    %862 = vmatprep.subr.mxu0 0.0
    %863 = vmatpush1.msra.mxu0 0.0
    %864 = vmatprep.subr.mxu0 0.0
    %865 = vmatpush1.msra.mxu0 0.0
    %866 = vmatprep.subr.mxu0 0.0
    %867 = vmatpush1.msra.mxu0 0.0
    %868 = vmatprep.mubr.f32.mxu0 0.0
    %869 = vmatmul.mubr.f32.gmra.mrb[0].mxu0 %v802
    %v870 = vpop.f32.mrb[0].mxu0
    %v871 = vadd.f32 %v798, %v870
    %v872 = vpop.f32.mrb[0].mxu0
    %873 = vdwg.mxu0
    %vm874 = vcmask 33792
    %875 = vst.msk [vmem:[#allocation4] sm:$0x3] %vm874, %v871
    // Predicated region
    $region34: #{resnet_forward.1} parent=1 // pred_check
      _
    $region35: #{resnet_forward.1} parent=1 // pred_check_branch
      %877 = sbr.rel (0) target = $region37
    $region36: #{resnet_forward.1} parent=1 // pred_region
      %s879 = ssub.s32 32, 32
      %880 = vsyncadd [#allocation5], %s879
      %s882 = sshll.u32 [#allocation4], 4
      %s883 = int_to_ptr.vmem [resolvable:$true] %s882
      %885 = dma.vmem_to_hbm [thread:$0]  %s883, 32, %s8, [#allocation5]
    $region37: #{resnet_forward.1} parent=1 // pred_fallthru
      _
    // Predicated region
    $region38: #{resnet_forward.1} parent=1 // pred_check
      _
    $region39: #{resnet_forward.1} parent=1 // pred_check_branch
      %887 = sbr.rel (0) target = $region41
    $region40: #{resnet_forward.1} parent=1 // pred_region
      %888 = dma.done [#allocation5], 32
    $region41: #{resnet_forward.1} parent=1 // pred_fallthru
      _
    %889 = vsyncpa [#allocation5], 1

</llo_original>
